<compile_context>
chip_gen: v6e
topology: v6e:2x2x1
jax: 0.10.0
libtpu: 0.0.40
codegen_flags: <defaults>
</compile_context>

<pallas_src>
import math

import jax
import jax.numpy as jnp
from jax.experimental import pallas as pl
from jax.experimental.pallas import tpu as pltpu

_STRIP = 1024                       # lanes processed per inner step (keeps the f32 acc tiny)
_VMEM_BUDGET = 12 * 1024 * 1024     # bytes for the double-buffered in + out blocks


def _round_up(x, m):
    return ((x + m - 1) // m) * m


def outconv_kernel(x_ref, w_ref, b_ref, o_ref):
    # x_ref: (Nb, C_in, t_hw)   channel-major pixel slab for Nb images
    # w_ref: (C_out, C_in)      1x1 conv weight
    # b_ref: (C_out, 1)         bias (f32)
    # o_ref: (Nb, C_out, t_hw)
    w = w_ref[...]
    b = b_ref[...]
    n_b, _, t_hw = x_ref.shape
    strip = min(t_hw, _STRIP)
    n_strips = t_hw // strip        # exact: t_hw is a multiple of strip by construction

    def strip_body(s, carry):
        off = pl.multiple_of(s * strip, strip)

        def img_body(n, c):
            xs = x_ref[n, :, pl.ds(off, strip)]                         # (C_in, strip)
            acc = jnp.dot(w, xs, preferred_element_type=jnp.float32)    # (C_out, strip) f32
            acc = acc + b                                               # lane-broadcast bias
            o_ref[n, :, pl.ds(off, strip)] = jnp.tanh(acc).astype(o_ref.dtype)
            return c

        return jax.lax.fori_loop(0, n_b, img_body, carry, unroll=n_b <= 8)

    jax.lax.fori_loop(0, n_strips, strip_body, 0, unroll=n_strips <= 4)


def _choose_tiling(N, HW, C_in, C_out, itemsize):
    """Pick (pixels-per-block, images-per-block) from a VMEM byte budget."""
    per_col = 2 * (C_in + C_out) * itemsize          # double-buffered in + out bytes per column
    cols_budget = max(128, (_VMEM_BUDGET // per_col) // 128 * 128)
    t_hw = min(_round_up(HW, 128), cols_budget)
    if t_hw > _STRIP:                                # keep the inner strip loop even
        t_hw = (t_hw // _STRIP) * _STRIP
    n_b = max(1, min(N, cols_budget // t_hw))        # pack images when the image is small
    return t_hw, n_b


def out_conv(x_nchw, weight, bias):
    """1x1 conv + tanh; matches nn.Conv2d(C_in, C_out, kernel_size=1) -> Tanh.

    x_nchw: (N, C_in, H, W); weight: (C_out, C_in, 1, 1); bias: (C_out,).
    Returns (N, C_out, H, W).
    """
    N, C_in, H, W = x_nchw.shape
    C_out = weight.shape[0]
    HW = H * W

    x3d = x_nchw.reshape(N, C_in, HW)                          # contiguous, free
    w2d = weight.reshape(C_out, C_in).astype(x_nchw.dtype)
    b2d = bias.reshape(C_out, 1).astype(jnp.float32)

    t_hw, n_b = _choose_tiling(N, HW, C_in, C_out, x_nchw.dtype.itemsize)
    hw_tiles = pl.cdiv(HW, t_hw)
    n_tiles = pl.cdiv(N, n_b)

    # Larger-extent parallel axis first (helps megacore sharding on v7x).
    if hw_tiles >= n_tiles:
        grid = (hw_tiles, n_tiles)
        xo_map = lambda j, n: (n, 0, j)
        wb_map = lambda j, n: (0, 0)
    else:
        grid = (n_tiles, hw_tiles)
        xo_map = lambda n, j: (n, 0, j)
        wb_map = lambda n, j: (0, 0)

    out3d = pl.pallas_call(
        outconv_kernel,
        out_shape=jax.ShapeDtypeStruct((N, C_out, HW), x_nchw.dtype),
        grid_spec=pltpu.PrefetchScalarGridSpec(
            num_scalar_prefetch=0,
            grid=grid,
            in_specs=[
                # (Nb images) x (C_in channels) x (t_hw pixels) slab per step.
                pl.BlockSpec((n_b, C_in, t_hw), xo_map),
                # Tiny weight / bias: constant index map -> stays resident in VMEM.
                pl.BlockSpec((C_out, C_in), wb_map),
                pl.BlockSpec((C_out, 1), wb_map),
            ],
            out_specs=pl.BlockSpec((n_b, C_out, t_hw), xo_map),
        ),
        compiler_params=pltpu.CompilerParams(
            dimension_semantics=("parallel", "parallel")),
    )(x3d, w2d, b2d)

    return out3d.reshape(N, C_out, H, W)


def init_params(key, in_channels, out_channels):
    # Deterministic init mimicking nn.Conv2d defaults (kaiming-uniform-ish).
    kw, kb = jax.random.split(key)
    fan_in = in_channels * 1 * 1
    bound_w = math.sqrt(1.0 / fan_in) * math.sqrt(3.0)   # kaiming_uniform(a=sqrt(5))
    weight = jax.random.uniform(
        kw, (out_channels, in_channels, 1, 1), jnp.float32, -bound_w, bound_w)
    bound_b = 1.0 / math.sqrt(fan_in)
    bias = jax.random.uniform(kb, (out_channels,), jnp.float32, -bound_b, bound_b)
    return weight, bias


def _reference(x, weight, bias):
    C_out, C_in = weight.shape[0], weight.shape[1]
    return jnp.tanh(
        jnp.einsum("nchw,oc->nohw", x, weight.reshape(C_out, C_in))
        + bias.reshape(1, C_out, 1, 1))


if __name__ == "__main__":
    key = jax.random.PRNGKey(0)
    kx, kp, kx2, kp2 = jax.random.split(key, 4)

    # Main test: module-implied small shape.
    N, C_in, H, W = 2, 4, 16, 16
    C_out = 3
    x = jax.random.normal(kx, (N, C_in, H, W), jnp.float32)
    weight, bias = init_params(kp, C_in, C_out)
    out = jax.block_until_ready(out_conv(x, weight, bias))
    ref = _reference(x, weight, bias)
    assert out.shape == (N, C_out, H, W)
    assert jnp.allclose(out, ref, atol=1e-5), "mismatch vs reference (main)"

    # Ragged test: H*W not a multiple of 128 — exercises the no-pad path where
    # Pallas clips the read block and masks the writeback of the tail lanes.
    N2, C_in2, H2, W2, C_out2 = 3, 5, 10, 13, 3
    x2 = jax.random.normal(kx2, (N2, C_in2, H2, W2), jnp.float32)
    weight2, bias2 = init_params(kp2, C_in2, C_out2)
    out2 = jax.block_until_ready(out_conv(x2, weight2, bias2))
    ref2 = _reference(x2, weight2, bias2)
    assert out2.shape == (N2, C_out2, H2, W2)
    assert jnp.allclose(out2, ref2, atol=1e-5), "mismatch vs reference (ragged)"

    print("KERNEL_OK")
</pallas_src>

<mosaic_0001>
module attributes {stable_mosaic.version = 11 : i64} {
  func.func @outconv_kernel(%arg0: i32, %arg1: i32, %arg2: memref<2x4x256xf32, #tpu.memory_space<vmem>>, %arg3: memref<3x4xf32, #tpu.memory_space<vmem>>, %arg4: memref<3x1xf32, #tpu.memory_space<vmem>>, %arg5: memref<2x3x256xf32, #tpu.memory_space<vmem>>) attributes {dimension_semantics = [#tpu.dimension_semantics<parallel>, #tpu.dimension_semantics<parallel>], iteration_bounds = array<i64: 1, 1>, scalar_prefetch = 0 : i64, scratch_operands = 0 : i64, tpu.core_type = #tpu.core_type<tc>, window_params = [{transform_indices = @transform_0, window_bounds = array<i64: 2, 4, 256>}, {pipeline_mode = #tpu.pipeline_mode<synchronous>, transform_indices = @transform_1, window_bounds = array<i64: 3, 4>}, {pipeline_mode = #tpu.pipeline_mode<synchronous>, transform_indices = @transform_2, window_bounds = array<i64: 3, 1>}, {transform_indices = @transform_3, window_bounds = array<i64: 2, 3, 256>}]} {
    %c0 = arith.constant 0 : index
    %c0_0 = arith.constant 0 : index
    %0 = vector.load %arg3[%c0, %c0_0] : memref<3x4xf32, #tpu.memory_space<vmem>>, vector<3x4xf32>
    %c0_1 = arith.constant 0 : index
    %c0_2 = arith.constant 0 : index
    %1 = vector.load %arg4[%c0_1, %c0_2] : memref<3x1xf32, #tpu.memory_space<vmem>>, vector<3x1xf32>
    %c0_i32 = arith.constant 0 : i32
    %c256_i32 = arith.constant 256 : i32
    %2 = arith.muli %c0_i32, %c256_i32 : i32
    %3 = tpu.assume_multiple %2, 256 : i32
    %c0_i32_3 = arith.constant 0 : i32
    %4 = arith.index_cast %c0_i32_3 : i32 to index
    %c0_4 = arith.constant 0 : index
    %5 = arith.index_cast %3 : i32 to index
    %6 = vector.load %arg2[%4, %c0_4, %5] : memref<2x4x256xf32, #tpu.memory_space<vmem>>, vector<1x4x256xf32>
    %7 = vector.shape_cast %6 : vector<1x4x256xf32> to vector<4x256xf32>
    %cst = arith.constant dense<0.000000e+00> : vector<3x256xf32>
    %8 = tpu.matmul %0, %7, %cst {dimension_numbers = #tpu.dot_dimension_numbers<[1], [0], [0], [1], [0, 0, 1, 1], [], []>} : vector<3x4xf32>, vector<4x256xf32>, vector<3x256xf32> -> vector<3x256xf32>
    %9 = vector.broadcast %1 : vector<3x1xf32> to vector<3x256xf32>
    %10 = arith.addf %8, %9 : vector<3x256xf32>
    %11 = math.tanh %10 : vector<3x256xf32>
    %12 = arith.index_cast %c0_i32_3 : i32 to index
    %c0_5 = arith.constant 0 : index
    %13 = arith.index_cast %3 : i32 to index
    %14 = vector.load %arg5[%12, %c0_5, %13] : memref<2x3x256xf32, #tpu.memory_space<vmem>>, vector<1x3x256xf32>
    %15 = vector.shape_cast %14 : vector<1x3x256xf32> to vector<3x256xf32>
    %16 = vector.shape_cast %11 : vector<3x256xf32> to vector<1x3x256xf32>
    tpu.vector_store %arg5[%12, %c0_5, %13], %16 {strides = array<i32>} : memref<2x3x256xf32, #tpu.memory_space<vmem>>, vector<1x3x256xf32>,
    %c1_i32 = arith.constant 1 : i32
    %17 = arith.index_cast %c1_i32 : i32 to index
    %c0_6 = arith.constant 0 : index
    %18 = arith.index_cast %3 : i32 to index
    %19 = vector.load %arg2[%17, %c0_6, %18] : memref<2x4x256xf32, #tpu.memory_space<vmem>>, vector<1x4x256xf32>
    %20 = vector.shape_cast %19 : vector<1x4x256xf32> to vector<4x256xf32>
    %cst_7 = arith.constant dense<0.000000e+00> : vector<3x256xf32>
    %21 = tpu.matmul %0, %20, %cst_7 {dimension_numbers = #tpu.dot_dimension_numbers<[1], [0], [0], [1], [0, 0, 1, 1], [], []>} : vector<3x4xf32>, vector<4x256xf32>, vector<3x256xf32> -> vector<3x256xf32>
    %22 = vector.broadcast %1 : vector<3x1xf32> to vector<3x256xf32>
    %23 = arith.addf %21, %22 : vector<3x256xf32>
    %24 = math.tanh %23 : vector<3x256xf32>
    %25 = arith.index_cast %c1_i32 : i32 to index
    %c0_8 = arith.constant 0 : index
    %26 = arith.index_cast %3 : i32 to index
    %27 = vector.load %arg5[%25, %c0_8, %26] : memref<2x3x256xf32, #tpu.memory_space<vmem>>, vector<1x3x256xf32>
    %28 = vector.shape_cast %27 : vector<1x3x256xf32> to vector<3x256xf32>
    %29 = vector.shape_cast %24 : vector<3x256xf32> to vector<1x3x256xf32>
    tpu.vector_store %arg5[%25, %c0_8, %26], %29 {strides = array<i32>} : memref<2x3x256xf32, #tpu.memory_space<vmem>>, vector<1x3x256xf32>,
    %c2_i32 = arith.constant 2 : i32
    %c1_i32_9 = arith.constant 1 : i32
    return
  }
  func.func @transform_0(%arg0: i32, %arg1: i32) -> (i32, i32, i32) {
    %c0_i32 = arith.constant 0 : i32
    %c0_i32_0 = arith.constant 0 : i32
    return %arg1, %c0_i32, %arg0 : i32, i32, i32
  }
  func.func @transform_1(%arg0: i32, %arg1: i32) -> (i32, i32) {
    %c0_i32 = arith.constant 0 : i32
    %c0_i32_0 = arith.constant 0 : i32
    %c0_i32_1 = arith.constant 0 : i32
    return %c0_i32, %c0_i32_0 : i32, i32
  }
  func.func @transform_2(%arg0: i32, %arg1: i32) -> (i32, i32) {
    %c0_i32 = arith.constant 0 : i32
    %c0_i32_0 = arith.constant 0 : i32
    %c0_i32_1 = arith.constant 0 : i32
    return %c0_i32, %c0_i32_0 : i32, i32
  }
  func.func @transform_3(%arg0: i32, %arg1: i32) -> (i32, i32, i32) {
    %c0_i32 = arith.constant 0 : i32
    %c0_i32_0 = arith.constant 0 : i32
    return %arg1, %c0_i32, %arg0 : i32, i32, i32
  }
}

</mosaic_0001>

<llo_original>
// kernel: tpu_custom_call.1
$region0: #{tpu_custom_call.1}
  #allocation0 [shape = 'u32[]', space=smem, size = 0x4, offset = 0x4, fixed_abs, tag = 'smem constant byte address 0x4 - core index']
  #allocation1 [shape = 'u32[144,128]{1,0:T(1,128)}', space=vmem, size = 0x12000, scoped, tag = 'internal scratch']
  %s0 = inlined_call_operand.hbm [shape: f32[2,4,256], index: 0, kind: input, shape index: {}]
  %s1 = inlined_call_operand.vmem [shape: f32[3,4], index: 1, kind: input, shape index: {}]
  %s2 = inlined_call_operand.vmem [shape: f32[3,1], index: 2, kind: input, shape index: {}]
  %s3 = inlined_call_operand.vmem [shape: f32[2,3,256], index: 3, kind: output, shape index: {}]
  %s4 = sld [smem:[#allocation0]]
  $region26: #{tpu_custom_call.1} parent=0
    _
  %s6 = ssub.s32 1, %s4
  %s7 = scalar_select 0, %s6, %s4
  $region1: #{tpu_custom_call.1} parent=0
    #allocation2 [shape = 'u8[8192]{0}', space=vmem, size = 0x2000, scoped, tag = 'input window, operand 0, single buffered']
    #allocation3 [shape = 's32[1]{0}', space=sflag, size = 0x4, scoped, tag = 'scoped memory for tpu_custom_call.1']
    %8 = vsyncpa [#allocation3], 0
    // Predicated region
    $region2: #{tpu_custom_call.1} parent=1 // pred_check
      _
    $region3: #{tpu_custom_call.1} parent=1 // pred_check_branch
      %10 = sbr.rel (0) target = $region5
    $region4: #{tpu_custom_call.1} parent=1 // pred_region
      %s12 = ssub.s32 256, 256
      %13 = vsyncadd [#allocation3], %s12
      %s14 = sshll.u32 [#allocation2], 4
      %s15 = int_to_ptr.vmem [resolvable:$true] %s14
      %20 = dma.hbm_to_vmem [thread:$0]  %s0, 256, %s15, [#allocation3], 128, 128, 8
    $region5: #{tpu_custom_call.1} parent=1 // pred_fallthru
      _
    // Predicated region
    $region6: #{tpu_custom_call.1} parent=1 // pred_check
      _
    $region7: #{tpu_custom_call.1} parent=1 // pred_check_branch
      %22 = sbr.rel (0) target = $region9
    $region8: #{tpu_custom_call.1} parent=1 // pred_region
      _
    $region9: #{tpu_custom_call.1} parent=1 // pred_fallthru
      _
    // Predicated region
    $region10: #{tpu_custom_call.1} parent=1 // pred_check
      _
    $region11: #{tpu_custom_call.1} parent=1 // pred_check_branch
      %24 = sbr.rel (0) target = $region13
    $region12: #{tpu_custom_call.1} parent=1 // pred_region
      _
    $region13: #{tpu_custom_call.1} parent=1 // pred_fallthru
      _
    // Predicated region
    $region14: #{tpu_custom_call.1} parent=1 // pred_check
      _
    $region15: #{tpu_custom_call.1} parent=1 // pred_check_branch
      %26 = sbr.rel (0) target = $region17
    $region16: #{tpu_custom_call.1} parent=1 // pred_region
      %27 = dma.done [#allocation3], 256
    $region17: #{tpu_custom_call.1} parent=1 // pred_fallthru
      _
    %v28 = vld [vmem:[%s1] sm:$0x7]
    %v29 = vld [vmem:[%s2] sm:$0x7]
    %v30 = vld [vmem:[#allocation2] sm:$0xff]
    %32 = vset.pattern.permute.xlu0 0
    %33 = vperm.xlu0 %32, %v29
    %v34 = vpop.permute.xlu0 %33
    %v37 = vcombine.high %v30, %v30
    %vm38 = vcmask 31744
    %v40 = vsel %vm38, %v28, 0
    %vm42 = vcmask 1043456
    %v43 = vsel %vm42, %v30, 0
    %v45 = vsel %vm42, %v37, 0
    %47 = vmatprep.subr.mxu0 0.0
    %48 = vmatpush1.msra.mxu0 0.0
    %49 = vmatprep.subr.mxu0 0.0
    %50 = vmatpush1.msra.mxu0 0.0
    %51 = vmatprep.subr.mxu0 0.0
    %52 = vmatpush1.msra.mxu0 0.0
    %53 = vmatprep.subr.mxu0 0.0
    %54 = vmatpush1.msra.mxu0 0.0
    %55 = vmatprep.subr.mxu0 0.0
    %56 = vmatpush1.msra.mxu0 0.0
    %57 = vmatprep.subr.mxu0 0.0
    %58 = vmatpush1.msra.mxu0 0.0
    %59 = vmatprep.subr.mxu0 0.0
    %60 = vmatpush1.msra.mxu0 0.0
    %61 = vmatprep.subr.mxu0 0.0
    %62 = vmatpush1.msra.mxu0 0.0
    %63 = vmatprep.subr.mxu0 0.0
    %64 = vmatpush1.msra.mxu0 0.0
    %65 = vmatprep.subr.mxu0 0.0
    %66 = vmatpush1.msra.mxu0 0.0
    %67 = vmatprep.subr.mxu0 0.0
    %68 = vmatpush1.msra.mxu0 0.0
    %69 = vmatprep.subr.mxu0 0.0
    %70 = vmatpush1.msra.mxu0 0.0
    %71 = vmatprep.subr.mxu0 0.0
    %72 = vmatpush1.msra.mxu0 0.0
    %73 = vmatprep.subr.mxu0 0.0
    %74 = vmatpush1.msra.mxu0 0.0
    %75 = vmatprep.subr.mxu0 0.0
    %76 = vmatpush1.msra.mxu0 0.0
    %77 = vmatprep.subr.mxu0 %v45
    %78 = vmatpush1.msra.mxu0 %v43
    %79 = vmatprep.subr.mxu0 0.0
    %80 = vmatpush2.msra.mxu0 0.0
    %81 = vmatprep.subr.mxu0 0.0
    %82 = vmatpush2.msra.mxu0 0.0
    %83 = vmatprep.subr.mxu0 0.0
    %84 = vmatpush2.msra.mxu0 0.0
    %85 = vmatprep.subr.mxu0 0.0
    %86 = vmatpush2.msra.mxu0 0.0
    %87 = vmatprep.subr.mxu0 0.0
    %88 = vmatpush2.msra.mxu0 0.0
    %89 = vmatprep.subr.mxu0 0.0
    %90 = vmatpush2.msra.mxu0 0.0
    %91 = vmatprep.subr.mxu0 0.0
    %92 = vmatpush2.msra.mxu0 0.0
    %93 = vmatprep.subr.mxu0 0.0
    %94 = vmatpush2.msra.mxu0 0.0
    %95 = vmatprep.subr.mxu0 0.0
    %96 = vmatpush2.msra.mxu0 0.0
    %97 = vmatprep.subr.mxu0 0.0
    %98 = vmatpush2.msra.mxu0 0.0
    %99 = vmatprep.subr.mxu0 0.0
    %100 = vmatpush2.msra.mxu0 0.0
    %101 = vmatprep.subr.mxu0 0.0
    %102 = vmatpush2.msra.mxu0 0.0
    %103 = vmatprep.subr.mxu0 0.0
    %104 = vmatpush2.msra.mxu0 0.0
    %105 = vmatprep.subr.mxu0 0.0
    %106 = vmatpush2.msra.mxu0 0.0
    %107 = vmatprep.subr.mxu0 0.0
    %108 = vmatpush2.msra.mxu0 0.0
    %109 = vmatprep.subr.mxu0 0.0
    %110 = vmatpush2.msra.mxu0 0.0
    %111 = vmatprep.mubr.f32.mxu0 0.0
    %112 = vmatmul.mubr.f32.gmra.mxu0 %v40
    %v113 = vpop.f32.mrf.mxu0
    %v114 = vadd.f32 %v34, %v113
    %v115 = vpop.f32.mrf.mxu0
    %v116 = vadd.f32 %v34, %v115
    %117 = vdwg.mxu0
    %v118 = vtanh.pop %v114
    %v119 = vtanh.pop %v116
    %v122 = vcombine.low %v118, %v119
    %124 = vst [vmem:[%s3] sm:$0x77] %v122
    %s125 = sadd.s32 0, 2
    %s126 = smul.addr %s125, 4
    %s127 = scalar_lea.vmem [#allocation2], %s126
    %v128 = vld [vmem:[%s127] sm:$0xff]
    %v130 = vcombine.high %v128, %v128
    %v131 = vsel %vm42, %v128, 0
    %v133 = vsel %vm42, %v130, 0
    %135 = vmatprep.subr.mxu0 0.0
    %136 = vmatpush1.msra.mxu0 0.0
    %137 = vmatprep.subr.mxu0 0.0
    %138 = vmatpush1.msra.mxu0 0.0
    %139 = vmatprep.subr.mxu0 0.0
    %140 = vmatpush1.msra.mxu0 0.0
    %141 = vmatprep.subr.mxu0 0.0
    %142 = vmatpush1.msra.mxu0 0.0
    %143 = vmatprep.subr.mxu0 0.0
    %144 = vmatpush1.msra.mxu0 0.0
    %145 = vmatprep.subr.mxu0 0.0
    %146 = vmatpush1.msra.mxu0 0.0
    %147 = vmatprep.subr.mxu0 0.0
    %148 = vmatpush1.msra.mxu0 0.0
    %149 = vmatprep.subr.mxu0 0.0
    %150 = vmatpush1.msra.mxu0 0.0
    %151 = vmatprep.subr.mxu0 0.0
    %152 = vmatpush1.msra.mxu0 0.0
    %153 = vmatprep.subr.mxu0 0.0
    %154 = vmatpush1.msra.mxu0 0.0
    %155 = vmatprep.subr.mxu0 0.0
    %156 = vmatpush1.msra.mxu0 0.0
    %157 = vmatprep.subr.mxu0 0.0
    %158 = vmatpush1.msra.mxu0 0.0
    %159 = vmatprep.subr.mxu0 0.0
    %160 = vmatpush1.msra.mxu0 0.0
    %161 = vmatprep.subr.mxu0 0.0
    %162 = vmatpush1.msra.mxu0 0.0
    %163 = vmatprep.subr.mxu0 0.0
    %164 = vmatpush1.msra.mxu0 0.0
    %165 = vmatprep.subr.mxu0 %v133
    %166 = vmatpush1.msra.mxu0 %v131
    %167 = vmatprep.subr.mxu0 0.0
    %168 = vmatpush2.msra.mxu0 0.0
    %169 = vmatprep.subr.mxu0 0.0
    %170 = vmatpush2.msra.mxu0 0.0
    %171 = vmatprep.subr.mxu0 0.0
    %172 = vmatpush2.msra.mxu0 0.0
    %173 = vmatprep.subr.mxu0 0.0
    %174 = vmatpush2.msra.mxu0 0.0
    %175 = vmatprep.subr.mxu0 0.0
    %176 = vmatpush2.msra.mxu0 0.0
    %177 = vmatprep.subr.mxu0 0.0
    %178 = vmatpush2.msra.mxu0 0.0
    %179 = vmatprep.subr.mxu0 0.0
    %180 = vmatpush2.msra.mxu0 0.0
    %181 = vmatprep.subr.mxu0 0.0
    %182 = vmatpush2.msra.mxu0 0.0
    %183 = vmatprep.subr.mxu0 0.0
    %184 = vmatpush2.msra.mxu0 0.0
    %185 = vmatprep.subr.mxu0 0.0
    %186 = vmatpush2.msra.mxu0 0.0
    %187 = vmatprep.subr.mxu0 0.0
    %188 = vmatpush2.msra.mxu0 0.0
    %189 = vmatprep.subr.mxu0 0.0
    %190 = vmatpush2.msra.mxu0 0.0
    %191 = vmatprep.subr.mxu0 0.0
    %192 = vmatpush2.msra.mxu0 0.0
    %193 = vmatprep.subr.mxu0 0.0
    %194 = vmatpush2.msra.mxu0 0.0
    %195 = vmatprep.subr.mxu0 0.0
    %196 = vmatpush2.msra.mxu0 0.0
    %197 = vmatprep.subr.mxu0 0.0
    %198 = vmatpush2.msra.mxu0 0.0
    %199 = vmatprep.mubr.f32.mxu0 0.0
    %200 = vmatmul.mubr.f32.gmra.mxu0 %v40
    %v201 = vpop.f32.mrf.mxu0
    %v202 = vadd.f32 %v34, %v201
    %v203 = vpop.f32.mrf.mxu0
    %v204 = vadd.f32 %v34, %v203
    %205 = vdwg.mxu0
    %v206 = vtanh.pop %v202
    %v207 = vtanh.pop %v204
    %v210 = vcombine.low %v206, %v207
    %s212 = smul.addr %s125, 4
    %s213 = scalar_lea.vmem %s3, %s212
    %214 = vst [vmem:[%s213] sm:$0x77] %v210
    // Predicated region
    $region18: #{tpu_custom_call.1} parent=1 // pred_check
      _
    $region19: #{tpu_custom_call.1} parent=1 // pred_check_branch
      %216 = sbr.rel (0) target = $region21
    $region20: #{tpu_custom_call.1} parent=1 // pred_region
      _
    $region21: #{tpu_custom_call.1} parent=1 // pred_fallthru
      _
    // Predicated region
    $region22: #{tpu_custom_call.1} parent=1 // pred_check
      _
    $region23: #{tpu_custom_call.1} parent=1 // pred_check_branch
      %218 = sbr.rel (0) target = $region25
    $region24: #{tpu_custom_call.1} parent=1 // pred_region
      _
    $region25: #{tpu_custom_call.1} parent=1 // pred_fallthru
      _
    %219 = vsyncpa [#allocation3], 1

</llo_original>
